<compile_context>
chip_gen: v6e
topology: v6e:2x2x1
jax: 0.10.0
libtpu: 0.0.40
codegen_flags: <defaults>
</compile_context>

<pallas_src>
import jax
import jax.numpy as jnp
from jax.experimental import pallas as pl
from jax.experimental.pallas import tpu as pltpu


def _log_sigmoid(x):
    # numerically stable log(sigmoid(x)) = min(x, 0) - log1p(exp(-|x|))
    return jnp.minimum(x, 0.0) - jnp.log1p(jnp.exp(-jnp.abs(x)))


def match_assignment_kernel(desc0_ref, desc1_ref, wp_ref, bp_ref, wm_ref, bm_ref,
                            scores_ref, sim_ref):
    d0 = desc0_ref[...]            # (Bt, M, D)   input dtype (f32 or bf16)
    d1 = desc1_ref[...]            # (Bt, N, D)
    wp = wp_ref[...]               # (D, D)       pre-transposed & pre-scaled
    bp = bp_ref[...]               # (1, D)       f32, pre-scaled
    wm = wm_ref[...]               # (1, D)       f32
    bm = bm_ref[0, 0]              # scalar from SMEM

    Bt, M, D = d0.shape
    N = d1.shape[1]
    mm_dt = d0.dtype

    d0_2 = d0.reshape(Bt * M, D)
    d1_2 = d1.reshape(Bt * N, D)

    # --- final_proj (+ bias); 1/D**0.25 scale already folded into wp / bp.
    md0 = jnp.dot(d0_2, wp, preferred_element_type=jnp.float32) + bp     # (Bt*M, D) f32
    md1 = jnp.dot(d1_2, wp, preferred_element_type=jnp.float32) + bp     # (Bt*N, D) f32

    # --- sim = einsum('bmd,bnd->bmn'); contract last dims, no transpose.
    md0_b = md0.astype(mm_dt).reshape(Bt, M, D)
    md1_b = md1.astype(mm_dt).reshape(Bt, N, D)
    sim = jnp.einsum('bmd,bnd->bmn', md0_b, md1_b,
                     preferred_element_type=jnp.float32)                 # (Bt, M, N)

    # --- matchability logits on the VPU (broadcast-mul + lane reduce in f32).
    z0 = (jnp.sum(d0_2 * wm, axis=-1, keepdims=True) + bm).reshape(Bt, M, 1)
    z1 = (jnp.sum(d1_2 * wm, axis=-1, keepdims=True) + bm).reshape(Bt, N, 1)

    ls0 = _log_sigmoid(z0)                          # (Bt, M, 1)
    ls1 = _log_sigmoid(z1)                          # (Bt, N, 1)
    cert = ls0 + jnp.swapaxes(ls1, 1, 2)            # (Bt, M, N)

    # --- double log-softmax sharing a single exp() (global-max shift).
    g = jnp.max(jnp.max(sim, axis=2, keepdims=True), axis=1, keepdims=True)  # (Bt,1,1)
    e = jnp.exp(sim - g)
    row_lse = g + jnp.log(jnp.sum(e, axis=2, keepdims=True))    # (Bt, M, 1)
    col_lse = g + jnp.log(jnp.sum(e, axis=1, keepdims=True))    # (Bt, 1, N)
    inner = (sim - row_lse) + (sim - col_lse) + cert            # (Bt, M, N)

    out_dt = scores_ref.dtype
    sim_ref[...] = sim.astype(sim_ref.dtype)

    # Piecewise scores write -- every element covered, no zero pre-store.
    scores_ref[:, 0:M, 0:N] = inner.astype(out_dt)
    scores_ref[:, 0:M, N:N + 1] = (ls0 - z0).astype(out_dt)                    # logsigmoid(-z0)
    scores_ref[:, M:M + 1, 0:N] = jnp.swapaxes(ls1 - z1, 1, 2).astype(out_dt)  # logsigmoid(-z1)
    scores_ref[:, M:M + 1, N:N + 1] = jnp.zeros((Bt, 1, 1), out_dt)


def _pick_block_b(B, M, N, D, in_bytes, out_bytes, budget_bytes=48 << 20):
    """Largest divisor of B whose per-step resident set fits a VMEM budget."""
    per_b = (2 * (M + N) * D * in_bytes                          # desc blocks, dbl-buffered
             + 2 * ((M + 1) * (N + 1) + M * N) * out_bytes       # outputs, dbl-buffered
             + 6 * M * N * 4)                                    # f32 intermediates
    bt = int(max(1, min(B, budget_bytes // max(per_b, 1))))
    while B % bt:
        bt -= 1
    return bt


def match_assignment(desc0, desc1, w_proj, b_proj, w_match, b_match, *, block_b=None):
    """desc0: (B, M, D), desc1: (B, N, D).
    w_proj: (D, D) pre-transposed (in, out). b_proj: (D,).
    w_match: (D,) or (D, 1). b_match: scalar.
    Returns (scores (B, M+1, N+1), sim (B, M, N)) in the descriptor dtype."""
    B, M, D = desc0.shape
    _, N, _ = desc1.shape
    in_dt = desc0.dtype
    out_dt = in_dt
    in_bytes = jnp.dtype(in_dt).itemsize
    out_bytes = jnp.dtype(out_dt).itemsize

    scale = 1.0 / float(D) ** 0.25
    wp = (w_proj.astype(jnp.float32) * scale).astype(in_dt)      # (D, D), pre-scaled
    bp = (b_proj.astype(jnp.float32) * scale).reshape(1, D)      # (1, D)  f32, pre-scaled
    wm = w_match.astype(jnp.float32).reshape(1, D)               # (1, D)  f32
    bm = jnp.asarray(b_match, jnp.float32).reshape(1, 1)         # (1, 1)  f32 -> SMEM

    Bt = block_b if block_b is not None else _pick_block_b(B, M, N, D, in_bytes, out_bytes)
    assert B % Bt == 0, "block_b must divide the batch size"

    per_step = (2 * Bt * (M + N) * D * in_bytes
                + 2 * Bt * ((M + 1) * (N + 1) + M * N) * out_bytes
                + 6 * Bt * M * N * 4
                + 4 * D * (D + 2))
    vmem_limit = int(min(112 << 20, max(32 << 20, 2 * per_step)))

    grid_spec = pltpu.PrefetchScalarGridSpec(
        num_scalar_prefetch=0,
        grid=(B // Bt,),
        in_specs=[
            pl.BlockSpec((Bt, M, D), lambda b: (b, 0, 0)),
            pl.BlockSpec((Bt, N, D), lambda b: (b, 0, 0)),
            pl.BlockSpec((D, D), lambda b: (0, 0)),
            pl.BlockSpec((1, D), lambda b: (0, 0)),
            pl.BlockSpec((1, D), lambda b: (0, 0)),
            pl.BlockSpec(memory_space=pltpu.MemorySpace.SMEM),   # b_match scalar
        ],
        out_specs=[
            pl.BlockSpec((Bt, M + 1, N + 1), lambda b: (b, 0, 0)),
            pl.BlockSpec((Bt, M, N), lambda b: (b, 0, 0)),
        ],
    )

    # TODO(synk): for very large M/N on v7x (64 MiB VMEM), add an M-tile grid axis
    # with a two-pass column softmax and shard the M tiles across the 2 TensorCores.
    return pl.pallas_call(
        match_assignment_kernel,
        out_shape=(
            jax.ShapeDtypeStruct((B, M + 1, N + 1), out_dt),
            jax.ShapeDtypeStruct((B, M, N), out_dt),
        ),
        grid_spec=grid_spec,
        compiler_params=pltpu.CompilerParams(
            dimension_semantics=("parallel",),
            vmem_limit_bytes=vmem_limit),
    )(desc0, desc1.astype(in_dt), wp, bp, wm, bm)


def match_assignment_ref(desc0, desc1, w_proj, b_proj, w_match, b_match):
    """Pure-JAX reference mirroring the PyTorch module."""
    D = desc0.shape[-1]
    md0 = desc0 @ w_proj + b_proj
    md1 = desc1 @ w_proj + b_proj
    md0 = md0 / D ** 0.25
    md1 = md1 / D ** 0.25
    sim = jnp.einsum("bmd,bnd->bmn", md0, md1)
    z0 = desc0 @ w_match.reshape(D, 1) + b_match       # (B, M, 1)
    z1 = desc1 @ w_match.reshape(D, 1) + b_match       # (B, N, 1)
    cert = jax.nn.log_sigmoid(z0) + jnp.swapaxes(jax.nn.log_sigmoid(z1), 1, 2)
    s0 = jax.nn.log_softmax(sim, axis=2)
    s1 = jax.nn.log_softmax(sim, axis=1)
    B, M, N = sim.shape
    scores = jnp.zeros((B, M + 1, N + 1), jnp.float32)
    scores = scores.at[:, :M, :N].set(s0 + s1 + cert)
    scores = scores.at[:, :M, N].set(jax.nn.log_sigmoid(-z0[..., 0]))
    scores = scores.at[:, M, :N].set(jax.nn.log_sigmoid(-z1[..., 0]))
    return scores, sim


if __name__ == "__main__":
    B, M, N, D = 2, 8, 8, 32
    key = jax.random.PRNGKey(0)
    k0, k1, k2, k3, k4, k5 = jax.random.split(key, 6)

    desc0 = jax.random.normal(k0, (B, M, D), jnp.float32)
    desc1 = jax.random.normal(k1, (B, N, D), jnp.float32)
    # Deterministic "Linear" params (stored pre-transposed: (in, out)).
    w_proj = jax.random.normal(k2, (D, D), jnp.float32) * (1.0 / jnp.sqrt(D))
    b_proj = jax.random.normal(k3, (D,), jnp.float32) * 0.1
    w_match = jax.random.normal(k4, (D, 1), jnp.float32) * (1.0 / jnp.sqrt(D))
    b_match = jax.random.normal(k5, (), jnp.float32) * 0.1

    scores, sim = match_assignment(desc0, desc1, w_proj, b_proj, w_match, b_match)
    jax.block_until_ready((scores, sim))

    scores_r, sim_r = match_assignment_ref(desc0, desc1, w_proj, b_proj,
                                           w_match, b_match)
    assert jnp.allclose(sim, sim_r, atol=1e-3, rtol=1e-3)
    assert jnp.allclose(scores, scores_r, atol=1e-3, rtol=1e-3)

    # bf16 fast path: native MXU dtype, halved descriptor + output HBM traffic.
    scores_bf, sim_bf = match_assignment(desc0.astype(jnp.bfloat16),
                                         desc1.astype(jnp.bfloat16),
                                         w_proj, b_proj, w_match, b_match)
    jax.block_until_ready((scores_bf, sim_bf))

    print("KERNEL_OK")
</pallas_src>

<mosaic_0001>
module attributes {stable_mosaic.version = 11 : i64} {
  func.func @match_assignment_kernel(%arg0: i32, %arg1: memref<2x8x32xf32, #tpu.memory_space<vmem>>, %arg2: memref<2x8x32xf32, #tpu.memory_space<vmem>>, %arg3: memref<32x32xf32, #tpu.memory_space<vmem>>, %arg4: memref<1x32xf32, #tpu.memory_space<vmem>>, %arg5: memref<1x32xf32, #tpu.memory_space<vmem>>, %arg6: memref<1x1xf32, #tpu.memory_space<smem>>, %arg7: memref<2x9x9xf32, #tpu.memory_space<vmem>>, %arg8: memref<2x8x8xf32, #tpu.memory_space<vmem>>) attributes {dimension_semantics = [#tpu.dimension_semantics<parallel>], iteration_bounds = array<i64: 1>, scalar_prefetch = 0 : i64, scratch_operands = 0 : i64, tpu.core_type = #tpu.core_type<tc>, window_params = [{transform_indices = @transform_0, window_bounds = array<i64: 2, 8, 32>}, {transform_indices = @transform_1, window_bounds = array<i64: 2, 8, 32>}, {pipeline_mode = #tpu.pipeline_mode<synchronous>, transform_indices = @transform_2, window_bounds = array<i64: 32, 32>}, {pipeline_mode = #tpu.pipeline_mode<synchronous>, transform_indices = @transform_3, window_bounds = array<i64: 1, 32>}, {pipeline_mode = #tpu.pipeline_mode<synchronous>, transform_indices = @transform_4, window_bounds = array<i64: 1, 32>}, {transform_indices = @transform_5, window_bounds = array<i64: 1, 1>}, {transform_indices = @transform_6, window_bounds = array<i64: 2, 9, 9>}, {transform_indices = @transform_7, window_bounds = array<i64: 2, 8, 8>}]} {
    %c0 = arith.constant 0 : index
    %c0_0 = arith.constant 0 : index
    %c0_1 = arith.constant 0 : index
    %0 = vector.load %arg1[%c0, %c0_0, %c0_1] : memref<2x8x32xf32, #tpu.memory_space<vmem>>, vector<2x8x32xf32>
    %c0_2 = arith.constant 0 : index
    %c0_3 = arith.constant 0 : index
    %c0_4 = arith.constant 0 : index
    %1 = vector.load %arg2[%c0_2, %c0_3, %c0_4] : memref<2x8x32xf32, #tpu.memory_space<vmem>>, vector<2x8x32xf32>
    %c0_5 = arith.constant 0 : index
    %c0_6 = arith.constant 0 : index
    %2 = vector.load %arg3[%c0_5, %c0_6] : memref<32x32xf32, #tpu.memory_space<vmem>>, vector<32x32xf32>
    %c0_7 = arith.constant 0 : index
    %c0_8 = arith.constant 0 : index
    %3 = vector.load %arg4[%c0_7, %c0_8] : memref<1x32xf32, #tpu.memory_space<vmem>>, vector<1x32xf32>
    %c0_9 = arith.constant 0 : index
    %c0_10 = arith.constant 0 : index
    %4 = vector.load %arg5[%c0_9, %c0_10] : memref<1x32xf32, #tpu.memory_space<vmem>>, vector<1x32xf32>
    %c0_11 = arith.constant 0 : index
    %c0_12 = arith.constant 0 : index
    %5 = memref.load %arg6[%c0_11, %c0_12] : memref<1x1xf32, #tpu.memory_space<smem>>
    %6 = vector.shape_cast %0 : vector<2x8x32xf32> to vector<16x32xf32>
    %7 = vector.shape_cast %1 : vector<2x8x32xf32> to vector<16x32xf32>
    %cst = arith.constant dense<0.000000e+00> : vector<16x32xf32>
    %8 = tpu.matmul %6, %2, %cst {dimension_numbers = #tpu.dot_dimension_numbers<[1], [0], [0], [1], [0, 0, 1, 1], [], []>} : vector<16x32xf32>, vector<32x32xf32>, vector<16x32xf32> -> vector<16x32xf32>
    %9 = vector.broadcast %3 : vector<1x32xf32> to vector<16x32xf32>
    %10 = arith.addf %8, %9 : vector<16x32xf32>
    %cst_13 = arith.constant dense<0.000000e+00> : vector<16x32xf32>
    %11 = tpu.matmul %7, %2, %cst_13 {dimension_numbers = #tpu.dot_dimension_numbers<[1], [0], [0], [1], [0, 0, 1, 1], [], []>} : vector<16x32xf32>, vector<32x32xf32>, vector<16x32xf32> -> vector<16x32xf32>
    %12 = vector.broadcast %3 : vector<1x32xf32> to vector<16x32xf32>
    %13 = arith.addf %11, %12 : vector<16x32xf32>
    %14 = vector.shape_cast %10 : vector<16x32xf32> to vector<2x8x32xf32>
    %15 = vector.shape_cast %13 : vector<16x32xf32> to vector<2x8x32xf32>
    "tpu.trace_start"() <{level = 10 : i32, message = "bmd,bnd->bmn"}> : () -> ()
    %cst_14 = arith.constant dense<0.000000e+00> : vector<2x8x8xf32>
    %16 = tpu.matmul %14, %15, %cst_14 {dimension_numbers = #tpu.dot_dimension_numbers<[2], [2], [1], [1], [0, 0, 0, 1, 1, 1], [0], [0]>} : vector<2x8x32xf32>, vector<2x8x32xf32>, vector<2x8x8xf32> -> vector<2x8x8xf32>
    "tpu.trace_stop"() : () -> ()
    %17 = vector.broadcast %4 : vector<1x32xf32> to vector<16x32xf32>
    %18 = arith.mulf %6, %17 : vector<16x32xf32>
    %cst_15 = arith.constant dense<0.000000e+00> : vector<16xf32>
    %19 = vector.multi_reduction <add>, %18, %cst_15 [1] : vector<16x32xf32> to vector<16xf32>
    %20 = vector.shape_cast %19 : vector<16xf32> to vector<16x1xf32>
    %21 = vector.broadcast %5 : f32 to vector<16x1xf32>
    %22 = arith.addf %20, %21 : vector<16x1xf32>
    %23 = vector.shape_cast %22 : vector<16x1xf32> to vector<2x8x1xf32>
    %24 = vector.broadcast %4 : vector<1x32xf32> to vector<16x32xf32>
    %25 = arith.mulf %7, %24 : vector<16x32xf32>
    %cst_16 = arith.constant dense<0.000000e+00> : vector<16xf32>
    %26 = vector.multi_reduction <add>, %25, %cst_16 [1] : vector<16x32xf32> to vector<16xf32>
    %27 = vector.shape_cast %26 : vector<16xf32> to vector<16x1xf32>
    %28 = vector.broadcast %5 : f32 to vector<16x1xf32>
    %29 = arith.addf %27, %28 : vector<16x1xf32>
    %30 = vector.shape_cast %29 : vector<16x1xf32> to vector<2x8x1xf32>
    %cst_17 = arith.constant 0.000000e+00 : f32
    %31 = vector.broadcast %cst_17 : f32 to vector<2x8x1xf32>
    %32 = arith.minimumf %23, %31 : vector<2x8x1xf32>
    %33 = math.absf %23 : vector<2x8x1xf32>
    %cst_18 = arith.constant 0.000000e+00 : f32
    %34 = vector.broadcast %cst_18 : f32 to vector<2x8x1xf32>
    %35 = arith.subf %34, %33 : vector<2x8x1xf32>
    %36 = math.exp %35 : vector<2x8x1xf32>
    %37 = math.log1p %36 : vector<2x8x1xf32>
    %38 = arith.subf %32, %37 : vector<2x8x1xf32>
    %cst_19 = arith.constant 0.000000e+00 : f32
    %39 = vector.broadcast %cst_19 : f32 to vector<2x8x1xf32>
    %40 = arith.minimumf %30, %39 : vector<2x8x1xf32>
    %41 = math.absf %30 : vector<2x8x1xf32>
    %cst_20 = arith.constant 0.000000e+00 : f32
    %42 = vector.broadcast %cst_20 : f32 to vector<2x8x1xf32>
    %43 = arith.subf %42, %41 : vector<2x8x1xf32>
    %44 = math.exp %43 : vector<2x8x1xf32>
    %45 = math.log1p %44 : vector<2x8x1xf32>
    %46 = arith.subf %40, %45 : vector<2x8x1xf32>
    %47 = tpu.transpose %46, [0, 2, 1] : vector<2x8x1xf32> -> vector<2x1x8xf32>
    %48 = vector.broadcast %38 : vector<2x8x1xf32> to vector<2x8x8xf32>
    %49 = vector.broadcast %47 : vector<2x1x8xf32> to vector<2x8x8xf32>
    %50 = arith.addf %48, %49 : vector<2x8x8xf32>
    %cst_21 = arith.constant dense<0xFF800000> : vector<2x8xf32>
    %51 = vector.multi_reduction <maximumf>, %16, %cst_21 [2] : vector<2x8x8xf32> to vector<2x8xf32>
    %52 = vector.shape_cast %51 : vector<2x8xf32> to vector<2x8x1xf32>
    %cst_22 = arith.constant dense<0xFF800000> : vector<2x1xf32>
    %53 = vector.multi_reduction <maximumf>, %52, %cst_22 [1] : vector<2x8x1xf32> to vector<2x1xf32>
    %54 = vector.shape_cast %53 : vector<2x1xf32> to vector<2x1x1xf32>
    %55 = vector.broadcast %54 : vector<2x1x1xf32> to vector<2x8x8xf32>
    %56 = arith.subf %16, %55 : vector<2x8x8xf32>
    %57 = math.exp %56 : vector<2x8x8xf32>
    %cst_23 = arith.constant dense<0.000000e+00> : vector<2x8xf32>
    %58 = vector.multi_reduction <add>, %57, %cst_23 [2] : vector<2x8x8xf32> to vector<2x8xf32>
    %59 = vector.shape_cast %58 : vector<2x8xf32> to vector<2x8x1xf32>
    %60 = math.log %59 : vector<2x8x1xf32>
    %61 = vector.broadcast %54 : vector<2x1x1xf32> to vector<2x8x1xf32>
    %62 = arith.addf %61, %60 : vector<2x8x1xf32>
    %cst_24 = arith.constant dense<0.000000e+00> : vector<2x8xf32>
    %63 = vector.multi_reduction <add>, %57, %cst_24 [1] : vector<2x8x8xf32> to vector<2x8xf32>
    %64 = vector.shape_cast %63 : vector<2x8xf32> to vector<2x1x8xf32>
    %65 = math.log %64 : vector<2x1x8xf32>
    %66 = vector.broadcast %54 : vector<2x1x1xf32> to vector<2x1x8xf32>
    %67 = arith.addf %66, %65 : vector<2x1x8xf32>
    %68 = vector.broadcast %62 : vector<2x8x1xf32> to vector<2x8x8xf32>
    %69 = arith.subf %16, %68 : vector<2x8x8xf32>
    %70 = vector.broadcast %67 : vector<2x1x8xf32> to vector<2x8x8xf32>
    %71 = arith.subf %16, %70 : vector<2x8x8xf32>
    %72 = arith.addf %69, %71 : vector<2x8x8xf32>
    %73 = arith.addf %72, %50 : vector<2x8x8xf32>
    %c0_25 = arith.constant 0 : index
    %c0_26 = arith.constant 0 : index
    %c0_27 = arith.constant 0 : index
    %74 = vector.load %arg8[%c0_25, %c0_26, %c0_27] : memref<2x8x8xf32, #tpu.memory_space<vmem>>, vector<2x8x8xf32>
    tpu.vector_store %arg8[%c0_25, %c0_26, %c0_27], %16 {strides = array<i32>} : memref<2x8x8xf32, #tpu.memory_space<vmem>>, vector<2x8x8xf32>,
    %c0_28 = arith.constant 0 : index
    %c0_29 = arith.constant 0 : index
    %c0_30 = arith.constant 0 : index
    %75 = vector.load %arg7[%c0_28, %c0_29, %c0_30] : memref<2x9x9xf32, #tpu.memory_space<vmem>>, vector<2x8x8xf32>
    tpu.vector_store %arg7[%c0_28, %c0_29, %c0_30], %73 {strides = array<i32>} : memref<2x9x9xf32, #tpu.memory_space<vmem>>, vector<2x8x8xf32>,
    %76 = arith.subf %38, %23 : vector<2x8x1xf32>
    %c0_31 = arith.constant 0 : index
    %c0_32 = arith.constant 0 : index
    %c8 = arith.constant 8 : index
    %77 = vector.load %arg7[%c0_31, %c0_32, %c8] : memref<2x9x9xf32, #tpu.memory_space<vmem>>, vector<2x8x1xf32>
    tpu.vector_store %arg7[%c0_31, %c0_32, %c8], %76 {strides = array<i32>} : memref<2x9x9xf32, #tpu.memory_space<vmem>>, vector<2x8x1xf32>,
    %78 = arith.subf %46, %30 : vector<2x8x1xf32>
    %79 = tpu.transpose %78, [0, 2, 1] : vector<2x8x1xf32> -> vector<2x1x8xf32>
    %c0_33 = arith.constant 0 : index
    %c8_34 = arith.constant 8 : index
    %c0_35 = arith.constant 0 : index
    %80 = vector.load %arg7[%c0_33, %c8_34, %c0_35] : memref<2x9x9xf32, #tpu.memory_space<vmem>>, vector<2x1x8xf32>
    tpu.vector_store %arg7[%c0_33, %c8_34, %c0_35], %79 {strides = array<i32>} : memref<2x9x9xf32, #tpu.memory_space<vmem>>, vector<2x1x8xf32>,
    %cst_36 = arith.constant 0.000000e+00 : f32
    %81 = vector.broadcast %cst_36 : f32 to vector<2x1x1xf32>
    %c0_37 = arith.constant 0 : index
    %c8_38 = arith.constant 8 : index
    %c8_39 = arith.constant 8 : index
    %82 = vector.load %arg7[%c0_37, %c8_38, %c8_39] : memref<2x9x9xf32, #tpu.memory_space<vmem>>, vector<2x1x1xf32>
    tpu.vector_store %arg7[%c0_37, %c8_38, %c8_39], %81 {strides = array<i32>} : memref<2x9x9xf32, #tpu.memory_space<vmem>>, vector<2x1x1xf32>,
    return
  }
  func.func @transform_0(%arg0: i32) -> (i32, i32, i32) {
    %c0_i32 = arith.constant 0 : i32
    %c0_i32_0 = arith.constant 0 : i32
    %c0_i32_1 = arith.constant 0 : i32
    return %arg0, %c0_i32, %c0_i32_0 : i32, i32, i32
  }
  func.func @transform_1(%arg0: i32) -> (i32, i32, i32) {
    %c0_i32 = arith.constant 0 : i32
    %c0_i32_0 = arith.constant 0 : i32
    %c0_i32_1 = arith.constant 0 : i32
    return %arg0, %c0_i32, %c0_i32_0 : i32, i32, i32
  }
  func.func @transform_2(%arg0: i32) -> (i32, i32) {
    %c0_i32 = arith.constant 0 : i32
    %c0_i32_0 = arith.constant 0 : i32
    %c0_i32_1 = arith.constant 0 : i32
    return %c0_i32, %c0_i32_0 : i32, i32
  }
  func.func @transform_3(%arg0: i32) -> (i32, i32) {
    %c0_i32 = arith.constant 0 : i32
    %c0_i32_0 = arith.constant 0 : i32
    %c0_i32_1 = arith.constant 0 : i32
    return %c0_i32, %c0_i32_0 : i32, i32
  }
  func.func @transform_4(%arg0: i32) -> (i32, i32) {
    %c0_i32 = arith.constant 0 : i32
    %c0_i32_0 = arith.constant 0 : i32
    %c0_i32_1 = arith.constant 0 : i32
    return %c0_i32, %c0_i32_0 : i32, i32
  }
  func.func @transform_5(%arg0: i32) -> (i32, i32) {
    %c0_i32 = arith.constant 0 : i32
    %c0_i32_0 = arith.constant 0 : i32
    %c0_i32_1 = arith.constant 0 : i32
    return %c0_i32, %c0_i32_0 : i32, i32
  }
  func.func @transform_6(%arg0: i32) -> (i32, i32, i32) {
    %c0_i32 = arith.constant 0 : i32
    %c0_i32_0 = arith.constant 0 : i32
    %c0_i32_1 = arith.constant 0 : i32
    return %arg0, %c0_i32, %c0_i32_0 : i32, i32, i32
  }
  func.func @transform_7(%arg0: i32) -> (i32, i32, i32) {
    %c0_i32 = arith.constant 0 : i32
    %c0_i32_0 = arith.constant 0 : i32
    %c0_i32_1 = arith.constant 0 : i32
    return %arg0, %c0_i32, %c0_i32_0 : i32, i32, i32
  }
}

</mosaic_0001>

<llo_original>
// kernel: tpu_custom_call.1
$region0: #{tpu_custom_call.1}
  #allocation0 [shape = 'u32[]', space=smem, size = 0x4, offset = 0x4, fixed_abs, tag = 'smem constant byte address 0x4 - core index']
  #allocation1 [shape = 'u32[144,128]{1,0:T(1,128)}', space=vmem, size = 0x12000, scoped, tag = 'internal scratch']
  #allocation2 [shape = 'f32[1,1]{1,0:T(1,128)S(6)}', space=smem, size = 0x200, scoped, tag = 'scoped memory for tpu_custom_call.1']
  %s0 = inlined_call_operand.hbm [shape: f32[2,8,32], index: 0, kind: input, shape index: {}]
  %s1 = inlined_call_operand.hbm [shape: f32[2,8,32], index: 1, kind: input, shape index: {}]
  %s2 = inlined_call_operand.hbm [shape: f32[32,32], index: 2, kind: input, shape index: {}]
  %s3 = inlined_call_operand.vmem [shape: f32[1,32], index: 3, kind: input, shape index: {}]
  %s4 = inlined_call_operand.vmem [shape: f32[1,32], index: 4, kind: input, shape index: {}]
  %s5 = inlined_call_operand.<no memory space> [shape: f32[1,1], index: 5, kind: input, shape index: {}]
  %s6 = inlined_call_operand.vmem [shape: f32[2,9,9], index: 6, kind: output, shape index: {0}]
  %s7 = inlined_call_operand.hbm [shape: f32[2,8,8], index: 7, kind: output, shape index: {1}]
  %8 = xla_tuple %s6, %s7
  %s9 = sld [smem:[#allocation0]]
  $region54: #{tpu_custom_call.1} parent=0
    _
  %s11 = ssub.s32 1, %s9
  %s12 = scalar_select 0, %s11, %s9
  %13 = sst [smem:[#allocation2]] %s5
  $region1: #{tpu_custom_call.1} parent=0
    #allocation3 [shape = 'u8[8192]{0}', space=vmem, size = 0x2000, scoped, tag = 'input window, operand 0, single buffered']
    #allocation4 [shape = 's32[1]{0}', space=sflag, size = 0x4, scoped, tag = 'scoped memory for tpu_custom_call.1']
    #allocation5 [shape = 's32[1]{0}', space=sflag, size = 0x4, scoped, tag = 'scoped memory for tpu_custom_call.1']
    #allocation6 [shape = 'u8[8192]{0}', space=vmem, size = 0x2000, scoped, tag = 'input window, operand 1, single buffered']
    #allocation7 [shape = 's32[1]{0}', space=sflag, size = 0x4, scoped, tag = 'scoped memory for tpu_custom_call.1']
    #allocation8 [shape = 'u8[16384]{0}', space=vmem, size = 0x4000, scoped, tag = 'input window, operand 2, single buffered']
    #allocation9 [shape = 'u8[8192]{0}', space=vmem, size = 0x2000, scoped, tag = 'output window, operand 1, single buffered']
    %14 = vsyncpa [#allocation4], 0
    %15 = vsyncpa [#allocation7], 0
    %16 = vsyncpa [#allocation5], 0
    // Predicated region
    $region2: #{tpu_custom_call.1} parent=1 // pred_check
      _
    $region3: #{tpu_custom_call.1} parent=1 // pred_check_branch
      %18 = sbr.rel (0) target = $region5
    $region4: #{tpu_custom_call.1} parent=1 // pred_region
      %s20 = ssub.s32 256, 256
      %21 = vsyncadd [#allocation4], %s20
      %s22 = sshll.u32 [#allocation3], 4
      %s23 = int_to_ptr.vmem [resolvable:$true] %s22
      %28 = dma.hbm_to_vmem [thread:$0]  %s0, 256, %s23, [#allocation4], 128, 128, 8
    $region5: #{tpu_custom_call.1} parent=1 // pred_fallthru
      _
    // Predicated region
    $region6: #{tpu_custom_call.1} parent=1 // pred_check
      _
    $region7: #{tpu_custom_call.1} parent=1 // pred_check_branch
      %30 = sbr.rel (0) target = $region9
    $region8: #{tpu_custom_call.1} parent=1 // pred_region
      %s32 = ssub.s32 256, 256
      %33 = vsyncadd [#allocation7], %s32
      %s34 = sshll.u32 [#allocation6], 4
      %s35 = int_to_ptr.vmem [resolvable:$true] %s34
      %40 = dma.hbm_to_vmem [thread:$0]  %s1, 256, %s35, [#allocation7], 128, 128, 8
    $region9: #{tpu_custom_call.1} parent=1 // pred_fallthru
      _
    // Predicated region
    $region10: #{tpu_custom_call.1} parent=1 // pred_check
      _
    $region11: #{tpu_custom_call.1} parent=1 // pred_check_branch
      %42 = sbr.rel (0) target = $region13
    $region12: #{tpu_custom_call.1} parent=1 // pred_region
      %s44 = ssub.s32 512, 512
      %45 = vsyncadd [#allocation7], %s44
      %s46 = sshll.u32 [#allocation8], 4
      %s47 = int_to_ptr.vmem [resolvable:$true] %s46
      %52 = dma.hbm_to_vmem [thread:$0]  %s2, 512, %s47, [#allocation7], 128, 128, 8
    $region13: #{tpu_custom_call.1} parent=1 // pred_fallthru
      _
    // Predicated region
    $region14: #{tpu_custom_call.1} parent=1 // pred_check
      _
    $region15: #{tpu_custom_call.1} parent=1 // pred_check_branch
      %54 = sbr.rel (0) target = $region17
    $region16: #{tpu_custom_call.1} parent=1 // pred_region
      _
    $region17: #{tpu_custom_call.1} parent=1 // pred_fallthru
      _
    // Predicated region
    $region18: #{tpu_custom_call.1} parent=1 // pred_check
      _
    $region19: #{tpu_custom_call.1} parent=1 // pred_check_branch
      %56 = sbr.rel (0) target = $region21
    $region20: #{tpu_custom_call.1} parent=1 // pred_region
      _
    $region21: #{tpu_custom_call.1} parent=1 // pred_fallthru
      _
    // Predicated region
    $region22: #{tpu_custom_call.1} parent=1 // pred_check
      _
    $region23: #{tpu_custom_call.1} parent=1 // pred_check_branch
      %58 = sbr.rel (0) target = $region25
    $region24: #{tpu_custom_call.1} parent=1 // pred_region
      _
    $region25: #{tpu_custom_call.1} parent=1 // pred_fallthru
      _
    // Predicated region
    $region26: #{tpu_custom_call.1} parent=1 // pred_check
      _
    $region27: #{tpu_custom_call.1} parent=1 // pred_check_branch
      %60 = sbr.rel (0) target = $region29
    $region28: #{tpu_custom_call.1} parent=1 // pred_region
      %61 = dma.done [#allocation4], 256
    $region29: #{tpu_custom_call.1} parent=1 // pred_fallthru
      _
    // Predicated region
    $region30: #{tpu_custom_call.1} parent=1 // pred_check
      _
    $region31: #{tpu_custom_call.1} parent=1 // pred_check_branch
      %63 = sbr.rel (0) target = $region33
    $region32: #{tpu_custom_call.1} parent=1 // pred_region
      %64 = dma.done [#allocation7], 256
    $region33: #{tpu_custom_call.1} parent=1 // pred_fallthru
      _
    // Predicated region
    $region34: #{tpu_custom_call.1} parent=1 // pred_check
      _
    $region35: #{tpu_custom_call.1} parent=1 // pred_check_branch
      %66 = sbr.rel (0) target = $region37
    $region36: #{tpu_custom_call.1} parent=1 // pred_region
      %67 = dma.done [#allocation7], 512
    $region37: #{tpu_custom_call.1} parent=1 // pred_fallthru
      _
    %v68 = vld [vmem:[#allocation3] sm:$0xff]
    %v69 = vld [vmem:[#allocation3 + $0x8] sm:$0xff]
    %v70 = vld [vmem:[#allocation6] sm:$0xff]
    %v71 = vld [vmem:[#allocation6 + $0x8] sm:$0xff]
    %v72 = vld [vmem:[#allocation8] sm:$0xff]
    %v73 = vld [vmem:[#allocation8 + $0x8] sm:$0xff]
    %v74 = vld [vmem:[#allocation8 + $0x10] sm:$0xff]
    %v75 = vld [vmem:[#allocation8 + $0x18] sm:$0xff]
    %v76 = vld [vmem:[%s3] sm:$0x1]
    %v77 = vld [vmem:[%s4] sm:$0x1]
    %s78 = sld [smem:[#allocation2]]
    %v80 = vlaneseq
    %v81 = vshrl.u32 %v80, 7
    %v82 = vsub.s32 0, %v81
    %v83 = vrot.slane %v76, %v82
    %vm85 = vcmask 261120
    %v87 = vsel %vm85, %v68, 0
    %v90 = vsel %vm85, %v69, 0
    %92 = vmatprep.subr.mxu0 0.0
    %93 = vmatpush1.msra.mxu0 0.0
    %94 = vmatprep.subr.mxu0 0.0
    %95 = vmatpush1.msra.mxu0 0.0
    %96 = vmatprep.subr.mxu0 0.0
    %97 = vmatpush1.msra.mxu0 0.0
    %98 = vmatprep.subr.mxu0 0.0
    %99 = vmatpush1.msra.mxu0 0.0
    %100 = vmatprep.subr.mxu0 0.0
    %101 = vmatpush1.msra.mxu0 0.0
    %102 = vmatprep.subr.mxu0 0.0
    %103 = vmatpush1.msra.mxu0 0.0
    %104 = vmatprep.subr.mxu0 0.0
    %105 = vmatpush1.msra.mxu0 0.0
    %106 = vmatprep.subr.mxu0 0.0
    %107 = vmatpush1.msra.mxu0 0.0
    %108 = vmatprep.subr.mxu0 0.0
    %109 = vmatpush1.msra.mxu0 0.0
    %110 = vmatprep.subr.mxu0 0.0
    %111 = vmatpush1.msra.mxu0 0.0
    %112 = vmatprep.subr.mxu0 0.0
    %113 = vmatpush1.msra.mxu0 0.0
    %114 = vmatprep.subr.mxu0 0.0
    %115 = vmatpush1.msra.mxu0 0.0
    %116 = vmatprep.subr.mxu0 0.0
    %117 = vmatpush1.msra.mxu0 %v75
    %118 = vmatprep.subr.mxu0 0.0
    %119 = vmatpush1.msra.mxu0 %v74
    %120 = vmatprep.subr.mxu0 0.0
    %121 = vmatpush1.msra.mxu0 %v73
    %122 = vmatprep.subr.mxu0 0.0
    %123 = vmatpush1.msra.mxu0 %v72
    %124 = vmatprep.subr.mxu0 0.0
    %125 = vmatpush2.msra.mxu0 0.0
    %126 = vmatprep.subr.mxu0 0.0
    %127 = vmatpush2.msra.mxu0 0.0
    %128 = vmatprep.subr.mxu0 0.0
    %129 = vmatpush2.msra.mxu0 0.0
    %130 = vmatprep.subr.mxu0 0.0
    %131 = vmatpush2.msra.mxu0 0.0
    %132 = vmatprep.subr.mxu0 0.0
    %133 = vmatpush2.msra.mxu0 0.0
    %134 = vmatprep.subr.mxu0 0.0
    %135 = vmatpush2.msra.mxu0 0.0
    %136 = vmatprep.subr.mxu0 0.0
    %137 = vmatpush2.msra.mxu0 0.0
    %138 = vmatprep.subr.mxu0 0.0
    %139 = vmatpush2.msra.mxu0 0.0
    %140 = vmatprep.subr.mxu0 0.0
    %141 = vmatpush2.msra.mxu0 0.0
    %142 = vmatprep.subr.mxu0 0.0
    %143 = vmatpush2.msra.mxu0 0.0
    %144 = vmatprep.subr.mxu0 0.0
    %145 = vmatpush2.msra.mxu0 0.0
    %146 = vmatprep.subr.mxu0 0.0
    %147 = vmatpush2.msra.mxu0 0.0
    %148 = vmatprep.subr.mxu0 0.0
    %149 = vmatpush2.msra.mxu0 0.0
    %150 = vmatprep.subr.mxu0 0.0
    %151 = vmatpush2.msra.mxu0 0.0
    %152 = vmatprep.subr.mxu0 0.0
    %153 = vmatpush2.msra.mxu0 0.0
    %154 = vmatprep.subr.mxu0 0.0
    %155 = vmatpush2.msra.mxu0 0.0
    %156 = vmatprep.mubr.f32.mxu0 0.0
    %157 = vmatmul.mubr.f32.gmra.mxu0 %v87
    %v158 = vpop.f32.mrf.mxu0
    %v159 = vadd.f32 %v83, %v158
    %v160 = vpop.f32.mrf.mxu0
    %161 = vmatprep.mubr.f32.mxu0 0.0
    %162 = vmatmul.mubr.f32.gmra.mxu0 %v90
    %v163 = vpop.f32.mrf.mxu0
    %v164 = vadd.f32 %v83, %v163
    %v165 = vpop.f32.mrf.mxu0
    %166 = vdwg.mxu0
    %v168 = vsel %vm85, %v70, 0
    %v171 = vsel %vm85, %v71, 0
    %173 = vmatprep.subr.mxu0 0.0
    %174 = vmatpush1.msra.mxu0 0.0
    %175 = vmatprep.subr.mxu0 0.0
    %176 = vmatpush1.msra.mxu0 0.0
    %177 = vmatprep.subr.mxu0 0.0
    %178 = vmatpush1.msra.mxu0 0.0
    %179 = vmatprep.subr.mxu0 0.0
    %180 = vmatpush1.msra.mxu0 0.0
    %181 = vmatprep.subr.mxu0 0.0
    %182 = vmatpush1.msra.mxu0 0.0
    %183 = vmatprep.subr.mxu0 0.0
    %184 = vmatpush1.msra.mxu0 0.0
    %185 = vmatprep.subr.mxu0 0.0
    %186 = vmatpush1.msra.mxu0 0.0
    %187 = vmatprep.subr.mxu0 0.0
    %188 = vmatpush1.msra.mxu0 0.0
    %189 = vmatprep.subr.mxu0 0.0
    %190 = vmatpush1.msra.mxu0 0.0
    %191 = vmatprep.subr.mxu0 0.0
    %192 = vmatpush1.msra.mxu0 0.0
    %193 = vmatprep.subr.mxu0 0.0
    %194 = vmatpush1.msra.mxu0 0.0
    %195 = vmatprep.subr.mxu0 0.0
    %196 = vmatpush1.msra.mxu0 0.0
    %197 = vmatprep.subr.mxu0 0.0
    %198 = vmatpush1.msra.mxu0 %v75
    %199 = vmatprep.subr.mxu0 0.0
    %200 = vmatpush1.msra.mxu0 %v74
    %201 = vmatprep.subr.mxu0 0.0
    %202 = vmatpush1.msra.mxu0 %v73
    %203 = vmatprep.subr.mxu0 0.0
    %204 = vmatpush1.msra.mxu0 %v72
    %205 = vmatprep.subr.mxu0 0.0
    %206 = vmatpush2.msra.mxu0 0.0
    %207 = vmatprep.subr.mxu0 0.0
    %208 = vmatpush2.msra.mxu0 0.0
    %209 = vmatprep.subr.mxu0 0.0
    %210 = vmatpush2.msra.mxu0 0.0
    %211 = vmatprep.subr.mxu0 0.0
    %212 = vmatpush2.msra.mxu0 0.0
    %213 = vmatprep.subr.mxu0 0.0
    %214 = vmatpush2.msra.mxu0 0.0
    %215 = vmatprep.subr.mxu0 0.0
    %216 = vmatpush2.msra.mxu0 0.0
    %217 = vmatprep.subr.mxu0 0.0
    %218 = vmatpush2.msra.mxu0 0.0
    %219 = vmatprep.subr.mxu0 0.0
    %220 = vmatpush2.msra.mxu0 0.0
    %221 = vmatprep.subr.mxu0 0.0
    %222 = vmatpush2.msra.mxu0 0.0
    %223 = vmatprep.subr.mxu0 0.0
    %224 = vmatpush2.msra.mxu0 0.0
    %225 = vmatprep.subr.mxu0 0.0
    %226 = vmatpush2.msra.mxu0 0.0
    %227 = vmatprep.subr.mxu0 0.0
    %228 = vmatpush2.msra.mxu0 0.0
    %229 = vmatprep.subr.mxu0 0.0
    %230 = vmatpush2.msra.mxu0 0.0
    %231 = vmatprep.subr.mxu0 0.0
    %232 = vmatpush2.msra.mxu0 0.0
    %233 = vmatprep.subr.mxu0 0.0
    %234 = vmatpush2.msra.mxu0 0.0
    %235 = vmatprep.subr.mxu0 0.0
    %236 = vmatpush2.msra.mxu0 0.0
    %237 = vmatprep.mubr.f32.mxu0 0.0
    %238 = vmatmul.mubr.f32.gmra.mxu0 %v168
    %v239 = vpop.f32.mrf.mxu0
    %v240 = vadd.f32 %v83, %v239
    %v241 = vpop.f32.mrf.mxu0
    %242 = vmatprep.mubr.f32.mxu0 0.0
    %243 = vmatmul.mubr.f32.gmra.mxu0 %v171
    %v244 = vpop.f32.mrf.mxu0
    %v245 = vadd.f32 %v83, %v244
    %v246 = vpop.f32.mrf.mxu0
    %247 = vdwg.mxu0
    %v249 = vsel %vm85, %v159, 0
    %v252 = vsel %vm85, %v240, 0
    %254 = vmatprep.subr.mxu0 0.0
    %255 = vmatpush1.xpose.msra.mxu0 0.0
    %256 = vmatprep.subr.mxu0 0.0
    %257 = vmatpush1.xpose.msra.mxu0 0.0
    %258 = vmatprep.subr.mxu0 0.0
    %259 = vmatpush1.xpose.msra.mxu0 0.0
    %260 = vmatprep.subr.mxu0 0.0
    %261 = vmatpush1.xpose.msra.mxu0 0.0
    %262 = vmatprep.subr.mxu0 0.0
    %263 = vmatpush1.xpose.msra.mxu0 0.0
    %264 = vmatprep.subr.mxu0 0.0
    %265 = vmatpush1.xpose.msra.mxu0 0.0
    %266 = vmatprep.subr.mxu0 0.0
    %267 = vmatpush1.xpose.msra.mxu0 0.0
    %268 = vmatprep.subr.mxu0 0.0
    %269 = vmatpush1.xpose.msra.mxu0 0.0
    %270 = vmatprep.subr.mxu0 0.0
    %271 = vmatpush1.xpose.msra.mxu0 0.0
    %272 = vmatprep.subr.mxu0 0.0
    %273 = vmatpush1.xpose.msra.mxu0 0.0
    %274 = vmatprep.subr.mxu0 0.0
    %275 = vmatpush1.xpose.msra.mxu0 0.0
    %276 = vmatprep.subr.mxu0 0.0
    %277 = vmatpush1.xpose.msra.mxu0 0.0
    %278 = vmatprep.subr.mxu0 0.0
    %279 = vmatpush1.xpose.msra.mxu0 0.0
    %280 = vmatprep.subr.mxu0 0.0
    %281 = vmatpush1.xpose.msra.mxu0 0.0
    %282 = vmatprep.subr.mxu0 0.0
    %283 = vmatpush1.xpose.msra.mxu0 0.0
    %284 = vmatprep.subr.mxu0 0.0
    %285 = vmatpush1.xpose.msra.mxu0 %v252
    %286 = vmatprep.subr.mxu0 0.0
    %287 = vmatpush2.xpose.msra.mxu0 0.0
    %288 = vmatprep.subr.mxu0 0.0
    %289 = vmatpush2.xpose.msra.mxu0 0.0
    %290 = vmatprep.subr.mxu0 0.0
    %291 = vmatpush2.xpose.msra.mxu0 0.0
    %292 = vmatprep.subr.mxu0 0.0
    %293 = vmatpush2.xpose.msra.mxu0 0.0
    %294 = vmatprep.subr.mxu0 0.0
    %295 = vmatpush2.xpose.msra.mxu0 0.0
    %296 = vmatprep.subr.mxu0 0.0
    %297 = vmatpush2.xpose.msra.mxu0 0.0
    %298 = vmatprep.subr.mxu0 0.0
    %299 = vmatpush2.xpose.msra.mxu0 0.0
    %300 = vmatprep.subr.mxu0 0.0
    %301 = vmatpush2.xpose.msra.mxu0 0.0
    %302 = vmatprep.subr.mxu0 0.0
    %303 = vmatpush2.xpose.msra.mxu0 0.0
    %304 = vmatprep.subr.mxu0 0.0
    %305 = vmatpush2.xpose.msra.mxu0 0.0
    %306 = vmatprep.subr.mxu0 0.0
    %307 = vmatpush2.xpose.msra.mxu0 0.0
    %308 = vmatprep.subr.mxu0 0.0
    %309 = vmatpush2.xpose.msra.mxu0 0.0
    %310 = vmatprep.subr.mxu0 0.0
    %311 = vmatpush2.xpose.msra.mxu0 0.0
    %312 = vmatprep.subr.mxu0 0.0
    %313 = vmatpush2.xpose.msra.mxu0 0.0
    %314 = vmatprep.subr.mxu0 0.0
    %315 = vmatpush2.xpose.msra.mxu0 0.0
    %316 = vmatprep.subr.mxu0 0.0
    %317 = vmatpush2.xpose.msra.mxu0 0.0
    %318 = vmatprep.mubr.f32.mxu0 0.0
    %319 = vmatmul.mubr.f32.gmra.mxu0 %v249
    %v320 = vpop.f32.mrf.mxu0
    %v321 = vadd.f32 0.0, %v320
    %v322 = vpop.f32.mrf.mxu0
    %323 = vdwg.mxu0
    %v325 = vsel %vm85, %v164, 0
    %v328 = vsel %vm85, %v245, 0
    %330 = vmatprep.subr.mxu0 0.0
    %331 = vmatpush1.xpose.msra.mxu0 0.0
    %332 = vmatprep.subr.mxu0 0.0
    %333 = vmatpush1.xpose.msra.mxu0 0.0
    %334 = vmatprep.subr.mxu0 0.0
    %335 = vmatpush1.xpose.msra.mxu0 0.0
    %336 = vmatprep.subr.mxu0 0.0
    %337 = vmatpush1.xpose.msra.mxu0 0.0
    %338 = vmatprep.subr.mxu0 0.0
    %339 = vmatpush1.xpose.msra.mxu0 0.0
    %340 = vmatprep.subr.mxu0 0.0
    %341 = vmatpush1.xpose.msra.mxu0 0.0
    %342 = vmatprep.subr.mxu0 0.0
    %343 = vmatpush1.xpose.msra.mxu0 0.0
    %344 = vmatprep.subr.mxu0 0.0
    %345 = vmatpush1.xpose.msra.mxu0 0.0
    %346 = vmatprep.subr.mxu0 0.0
    %347 = vmatpush1.xpose.msra.mxu0 0.0
    %348 = vmatprep.subr.mxu0 0.0
    %349 = vmatpush1.xpose.msra.mxu0 0.0
    %350 = vmatprep.subr.mxu0 0.0
    %351 = vmatpush1.xpose.msra.mxu0 0.0
    %352 = vmatprep.subr.mxu0 0.0
    %353 = vmatpush1.xpose.msra.mxu0 0.0
    %354 = vmatprep.subr.mxu0 0.0
    %355 = vmatpush1.xpose.msra.mxu0 0.0
    %356 = vmatprep.subr.mxu0 0.0
    %357 = vmatpush1.xpose.msra.mxu0 0.0
    %358 = vmatprep.subr.mxu0 0.0
    %359 = vmatpush1.xpose.msra.mxu0 0.0
    %360 = vmatprep.subr.mxu0 0.0
    %361 = vmatpush1.xpose.msra.mxu0 %v328
    %362 = vmatprep.subr.mxu0 0.0
    %363 = vmatpush2.xpose.msra.mxu0 0.0
    %364 = vmatprep.subr.mxu0 0.0
    %365 = vmatpush2.xpose.msra.mxu0 0.0
    %366 = vmatprep.subr.mxu0 0.0
    %367 = vmatpush2.xpose.msra.mxu0 0.0
    %368 = vmatprep.subr.mxu0 0.0
    %369 = vmatpush2.xpose.msra.mxu0 0.0
    %370 = vmatprep.subr.mxu0 0.0
    %371 = vmatpush2.xpose.msra.mxu0 0.0
    %372 = vmatprep.subr.mxu0 0.0
    %373 = vmatpush2.xpose.msra.mxu0 0.0
    %374 = vmatprep.subr.mxu0 0.0
    %375 = vmatpush2.xpose.msra.mxu0 0.0
    %376 = vmatprep.subr.mxu0 0.0
    %377 = vmatpush2.xpose.msra.mxu0 0.0
    %378 = vmatprep.subr.mxu0 0.0
    %379 = vmatpush2.xpose.msra.mxu0 0.0
    %380 = vmatprep.subr.mxu0 0.0
    %381 = vmatpush2.xpose.msra.mxu0 0.0
    %382 = vmatprep.subr.mxu0 0.0
    %383 = vmatpush2.xpose.msra.mxu0 0.0
    %384 = vmatprep.subr.mxu0 0.0
    %385 = vmatpush2.xpose.msra.mxu0 0.0
    %386 = vmatprep.subr.mxu0 0.0
    %387 = vmatpush2.xpose.msra.mxu0 0.0
    %388 = vmatprep.subr.mxu0 0.0
    %389 = vmatpush2.xpose.msra.mxu0 0.0
    %390 = vmatprep.subr.mxu0 0.0
    %391 = vmatpush2.xpose.msra.mxu0 0.0
    %392 = vmatprep.subr.mxu0 0.0
    %393 = vmatpush2.xpose.msra.mxu0 0.0
    %394 = vmatprep.mubr.f32.mxu0 0.0
    %395 = vmatmul.mubr.f32.gmra.mxu0 %v325
    %v396 = vpop.f32.mrf.mxu0
    %v397 = vadd.f32 0.0, %v396
    %v398 = vpop.f32.mrf.mxu0
    %399 = vdwg.mxu0
    %v401 = vlaneseq
    %v402 = vshrl.u32 %v401, 7
    %v403 = vsub.s32 0, %v402
    %v404 = vrot.slane %v77, %v403
    %v406 = vmul.f32 %v68, %v404
    %v407 = vmul.f32 %v69, %v404
    %v408 = vsel %vm85, %v406, 0.0
    %409 = vadd.xlane.f32.xlu0 %v408
    %v410 = vpop.xlane.xlu0 %409
    %v411 = vsel %vm85, %v407, 0.0
    %412 = vadd.xlane.f32.xlu0 %v411
    %v413 = vpop.xlane.xlu0 %412
    %v414 = vstv %s78
    %v415 = vadd.f32 %v410, %v414
    %v416 = vadd.f32 %v413, %v414
    %v417 = vmul.f32 %v70, %v404
    %v418 = vmul.f32 %v71, %v404
    %v419 = vsel %vm85, %v417, 0.0
    %420 = vadd.xlane.f32.xlu0 %v419
    %v421 = vpop.xlane.xlu0 %420
    %v422 = vsel %vm85, %v418, 0.0
    %423 = vadd.xlane.f32.xlu0 %v422
    %v424 = vpop.xlane.xlu0 %423
    %v425 = vadd.f32 %v421, %v414
    %v426 = vadd.f32 %v424, %v414
    %v427 = vmin.f32 %v415, 0.0
    %v428 = vmin.f32 %v416, 0.0
    %v429 = vand.u32 2147483647, %v415
    %v430 = vand.u32 2147483647, %v416
    %v431 = vsub.f32 0.0, %v429
    %v432 = vsub.f32 0.0, %v430
    %v433 = vmul.f32 %v431, 1.442695
    %v434 = vpow.pop %v433
    %v435 = vmul.f32 %v432, 1.442695
    %v436 = vpow.pop %v435
    %v437 = vadd.f32 %v434, 1.0
    %v438 = vlog2.pop %v437
    %v439 = vmul.f32 %v438, 0.6931472
    %v440 = vmul.f32 -0.5, %v434
    %v441 = vadd.f32 %v440, 1.0
    %v442 = vmul.f32 %v441, %v434
    %v443 = vand.u32 2147483647, %v434
    %vm444 = vcmp.lt.f32.partialorder %v443, 0.0004427343
    %v445 = vsel %vm444, %v442, %v439
    %v446 = vadd.f32 %v436, 1.0
    %v447 = vlog2.pop %v446
    %v448 = vmul.f32 %v447, 0.6931472
    %v449 = vmul.f32 -0.5, %v436
    %v450 = vadd.f32 %v449, 1.0
    %v451 = vmul.f32 %v450, %v436
    %v452 = vand.u32 2147483647, %v436
    %vm453 = vcmp.lt.f32.partialorder %v452, 0.0004427343
    %v454 = vsel %vm453, %v451, %v448
    %v455 = vsub.f32 %v427, %v445
    %v456 = vsub.f32 %v428, %v454
    %v457 = vmin.f32 %v425, 0.0
    %v458 = vmin.f32 %v426, 0.0
    %v459 = vand.u32 2147483647, %v425
    %v460 = vand.u32 2147483647, %v426
    %v461 = vsub.f32 0.0, %v459
    %v462 = vsub.f32 0.0, %v460
    %v463 = vmul.f32 %v461, 1.442695
    %v464 = vpow.pop %v463
    %v465 = vmul.f32 %v462, 1.442695
    %v466 = vpow.pop %v465
    %v467 = vadd.f32 %v464, 1.0
    %v468 = vlog2.pop %v467
    %v469 = vmul.f32 %v468, 0.6931472
    %v470 = vmul.f32 -0.5, %v464
    %v471 = vadd.f32 %v470, 1.0
    %v472 = vmul.f32 %v471, %v464
    %v473 = vand.u32 2147483647, %v464
    %vm474 = vcmp.lt.f32.partialorder %v473, 0.0004427343
    %v475 = vsel %vm474, %v472, %v469
    %v476 = vadd.f32 %v466, 1.0
    %v477 = vlog2.pop %v476
    %v478 = vmul.f32 %v477, 0.6931472
    %v479 = vmul.f32 -0.5, %v466
    %v480 = vadd.f32 %v479, 1.0
    %v481 = vmul.f32 %v480, %v466
    %v482 = vand.u32 2147483647, %v466
    %vm483 = vcmp.lt.f32.partialorder %v482, 0.0004427343
    %v484 = vsel %vm483, %v481, %v478
    %v485 = vsub.f32 %v457, %v475
    %v486 = vsub.f32 %v458, %v484
    %487 = vxpose.xlu0.b32.start [1/16] %v485, 128
    %488 = vxpose.xlu0.b32.cont [2/16] 0.0, 128
    %489 = vxpose.xlu0.b32.cont [3/16] 0.0, 128
    %490 = vxpose.xlu0.b32.cont [4/16] 0.0, 128
    %491 = vxpose.xlu0.b32.cont [5/16] 0.0, 128
    %492 = vxpose.xlu0.b32.cont [6/16] 0.0, 128
    %493 = vxpose.xlu0.b32.cont [7/16] 0.0, 128
    %494 = vxpose.xlu0.b32.cont [8/16] 0.0, 128
    %495 = vxpose.xlu0.b32.cont [9/16] 0.0, 128
    %496 = vxpose.xlu0.b32.cont [10/16] 0.0, 128
    %497 = vxpose.xlu0.b32.cont [11/16] 0.0, 128
    %498 = vxpose.xlu0.b32.cont [12/16] 0.0, 128
    %499 = vxpose.xlu0.b32.cont [13/16] 0.0, 128
    %500 = vxpose.xlu0.b32.cont [14/16] 0.0, 128
    %501 = vxpose.xlu0.b32.cont [15/16] 0.0, 128
    %502 = vxpose.xlu0.b32.end [16/16] 0.0, 128
    %v503 = vpop.trf.xlu0
    %v504 = vpop.trf.xlu0
    %v505 = vpop.trf.xlu0
    %v506 = vpop.trf.xlu0
    %v507 = vpop.trf.xlu0
    %v508 = vpop.trf.xlu0
    %v509 = vpop.trf.xlu0
    %v510 = vpop.trf.xlu0
    %v511 = vpop.trf.xlu0
    %v512 = vpop.trf.xlu0
    %v513 = vpop.trf.xlu0
    %v514 = vpop.trf.xlu0
    %v515 = vpop.trf.xlu0
    %v516 = vpop.trf.xlu0
    %v517 = vpop.trf.xlu0
    %v518 = vpop.trf.xlu0
    %519 = vxpose.xlu0.b32.start [1/16] %v486, 128
    %520 = vxpose.xlu0.b32.cont [2/16] 0.0, 128
    %521 = vxpose.xlu0.b32.cont [3/16] 0.0, 128
    %522 = vxpose.xlu0.b32.cont [4/16] 0.0, 128
    %523 = vxpose.xlu0.b32.cont [5/16] 0.0, 128
    %524 = vxpose.xlu0.b32.cont [6/16] 0.0, 128
    %525 = vxpose.xlu0.b32.cont [7/16] 0.0, 128
    %526 = vxpose.xlu0.b32.cont [8/16] 0.0, 128
    %527 = vxpose.xlu0.b32.cont [9/16] 0.0, 128
    %528 = vxpose.xlu0.b32.cont [10/16] 0.0, 128
    %529 = vxpose.xlu0.b32.cont [11/16] 0.0, 128
    %530 = vxpose.xlu0.b32.cont [12/16] 0.0, 128
    %531 = vxpose.xlu0.b32.cont [13/16] 0.0, 128
    %532 = vxpose.xlu0.b32.cont [14/16] 0.0, 128
    %533 = vxpose.xlu0.b32.cont [15/16] 0.0, 128
    %534 = vxpose.xlu0.b32.end [16/16] 0.0, 128
    %v535 = vpop.trf.xlu0
    %v536 = vpop.trf.xlu0
    %v537 = vpop.trf.xlu0
    %v538 = vpop.trf.xlu0
    %v539 = vpop.trf.xlu0
    %v540 = vpop.trf.xlu0
    %v541 = vpop.trf.xlu0
    %v542 = vpop.trf.xlu0
    %v543 = vpop.trf.xlu0
    %v544 = vpop.trf.xlu0
    %v545 = vpop.trf.xlu0
    %v546 = vpop.trf.xlu0
    %v547 = vpop.trf.xlu0
    %v548 = vpop.trf.xlu0
    %v549 = vpop.trf.xlu0
    %v550 = vpop.trf.xlu0
    %v551 = vlaneseq
    %v552 = vshrl.u32 %v551, 7
    %v553 = vsub.s32 0, %v552
    %v554 = vrot.slane %v503, %v553
    %v555 = vlaneseq
    %v556 = vshrl.u32 %v555, 7
    %v557 = vsub.s32 0, %v556
    %v558 = vrot.slane %v535, %v557
    %v559 = vadd.f32 %v455, %v554
    %v560 = vadd.f32 %v456, %v558
    %vm561 = vcmask 64512
    %v562 = vsel %vm561, %v321, -inf
    %563 = vmax.xlane.f32.xlu0 %v562
    %v564 = vpop.xlane.xlu0 %563
    %v565 = vsel %vm561, %v397, -inf
    %566 = vmax.xlane.f32.xlu0 %v565
    %v567 = vpop.xlane.xlu0 %566
    %v568 = vrot.slane %v564, 4
    %v569 = vmax.f32 %v564, %v568
    %v570 = vrot.slane %v569, 2
    %v571 = vmax.f32 %v569, %v570
    %v572 = vrot.slane %v571, 1
    %v573 = vmax.f32 %v571, %v572
    %v574 = vrot.slane %v567, 4
    %v575 = vmax.f32 %v567, %v574
    %v576 = vrot.slane %v575, 2
    %v577 = vmax.f32 %v575, %v576
    %v578 = vrot.slane %v577, 1
    %v579 = vmax.f32 %v577, %v578
    %v580 = vsub.f32 %v321, %v573
    %v581 = vsub.f32 %v397, %v579
    %v582 = vmul.f32 %v580, 1.442695
    %v583 = vpow.pop %v582
    %v584 = vmul.f32 %v581, 1.442695
    %v585 = vpow.pop %v584
    %v586 = vsel %vm561, %v583, 0.0
    %587 = vadd.xlane.f32.xlu0 %v586
    %v588 = vpop.xlane.xlu0 %587
    %v589 = vsel %vm561, %v585, 0.0
    %590 = vadd.xlane.f32.xlu0 %v589
    %v591 = vpop.xlane.xlu0 %590
    %v592 = vlog2.pop %v588
    %v593 = vmul.f32 %v592, 0.6931472
    %v594 = vlog2.pop %v591
    %v595 = vmul.f32 %v594, 0.6931472
    %v596 = vadd.f32 %v573, %v593
    %v597 = vadd.f32 %v579, %v595
    %v598 = vrot.slane %v586, 4
    %v599 = vadd.f32 %v586, %v598
    %v600 = vrot.slane %v599, 2
    %v601 = vadd.f32 %v599, %v600
    %v602 = vrot.slane %v601, 1
    %v603 = vadd.f32 %v601, %v602
    %v604 = vrot.slane %v589, 4
    %v605 = vadd.f32 %v589, %v604
    %v606 = vrot.slane %v605, 2
    %v607 = vadd.f32 %v605, %v606
    %v608 = vrot.slane %v607, 1
    %v609 = vadd.f32 %v607, %v608
    %v610 = vlog2.pop %v603
    %v611 = vmul.f32 %v610, 0.6931472
    %v612 = vlog2.pop %v609
    %v613 = vmul.f32 %v612, 0.6931472
    %v614 = vadd.f32 %v573, %v611
    %v615 = vadd.f32 %v579, %v613
    %v616 = vsub.f32 %v321, %v596
    %v617 = vsub.f32 %v397, %v597
    %v618 = vsub.f32 %v321, %v614
    %v619 = vsub.f32 %v397, %v615
    %v620 = vadd.f32 %v616, %v618
    %v621 = vadd.f32 %v617, %v619
    %v622 = vadd.f32 %v620, %v559
    %v623 = vadd.f32 %v621, %v560
    %624 = vst.msk [vmem:[#allocation9] sm:$0xff] %vm561, %v321
    %625 = vst.msk [vmem:[#allocation9 + $0x8] sm:$0xff] %vm561, %v397
    %626 = vst.msk [vmem:[%s6] sm:$0xff] %vm561, %v622
    %627 = vst.msk [vmem:[%s6 + $0x10] sm:$0xff] %vm561, %v623
    %v628 = vsub.f32 %v455, %v415
    %v629 = vsub.f32 %v456, %v416
    %vm630 = vcmask 72768
    %631 = vst.msk [vmem:[%s6] sm:$0xff] %vm630, %v628
    %632 = vst.msk [vmem:[%s6 + $0x10] sm:$0xff] %vm630, %v629
    %v633 = vsub.f32 %v485, %v425
    %v634 = vsub.f32 %v486, %v426
    %635 = vxpose.xlu0.b32.start [1/16] %v633, 128
    %636 = vxpose.xlu0.b32.cont [2/16] 0.0, 128
    %637 = vxpose.xlu0.b32.cont [3/16] 0.0, 128
    %638 = vxpose.xlu0.b32.cont [4/16] 0.0, 128
    %639 = vxpose.xlu0.b32.cont [5/16] 0.0, 128
    %640 = vxpose.xlu0.b32.cont [6/16] 0.0, 128
    %641 = vxpose.xlu0.b32.cont [7/16] 0.0, 128
    %642 = vxpose.xlu0.b32.cont [8/16] 0.0, 128
    %643 = vxpose.xlu0.b32.cont [9/16] 0.0, 128
    %644 = vxpose.xlu0.b32.cont [10/16] 0.0, 128
    %645 = vxpose.xlu0.b32.cont [11/16] 0.0, 128
    %646 = vxpose.xlu0.b32.cont [12/16] 0.0, 128
    %647 = vxpose.xlu0.b32.cont [13/16] 0.0, 128
    %648 = vxpose.xlu0.b32.cont [14/16] 0.0, 128
    %649 = vxpose.xlu0.b32.cont [15/16] 0.0, 128
    %650 = vxpose.xlu0.b32.end [16/16] 0.0, 128
    %v651 = vpop.trf.xlu0
    %v652 = vpop.trf.xlu0
    %v653 = vpop.trf.xlu0
    %v654 = vpop.trf.xlu0
    %v655 = vpop.trf.xlu0
    %v656 = vpop.trf.xlu0
    %v657 = vpop.trf.xlu0
    %v658 = vpop.trf.xlu0
    %v659 = vpop.trf.xlu0
    %v660 = vpop.trf.xlu0
    %v661 = vpop.trf.xlu0
    %v662 = vpop.trf.xlu0
    %v663 = vpop.trf.xlu0
    %v664 = vpop.trf.xlu0
    %v665 = vpop.trf.xlu0
    %v666 = vpop.trf.xlu0
    %667 = vxpose.xlu0.b32.start [1/16] %v634, 128
    %668 = vxpose.xlu0.b32.cont [2/16] 0.0, 128
    %669 = vxpose.xlu0.b32.cont [3/16] 0.0, 128
    %670 = vxpose.xlu0.b32.cont [4/16] 0.0, 128
    %671 = vxpose.xlu0.b32.cont [5/16] 0.0, 128
    %672 = vxpose.xlu0.b32.cont [6/16] 0.0, 128
    %673 = vxpose.xlu0.b32.cont [7/16] 0.0, 128
    %674 = vxpose.xlu0.b32.cont [8/16] 0.0, 128
    %675 = vxpose.xlu0.b32.cont [9/16] 0.0, 128
    %676 = vxpose.xlu0.b32.cont [10/16] 0.0, 128
    %677 = vxpose.xlu0.b32.cont [11/16] 0.0, 128
    %678 = vxpose.xlu0.b32.cont [12/16] 0.0, 128
    %679 = vxpose.xlu0.b32.cont [13/16] 0.0, 128
    %680 = vxpose.xlu0.b32.cont [14/16] 0.0, 128
    %681 = vxpose.xlu0.b32.cont [15/16] 0.0, 128
    %682 = vxpose.xlu0.b32.end [16/16] 0.0, 128
    %v683 = vpop.trf.xlu0
    %v684 = vpop.trf.xlu0
    %v685 = vpop.trf.xlu0
    %v686 = vpop.trf.xlu0
    %v687 = vpop.trf.xlu0
    %v688 = vpop.trf.xlu0
    %v689 = vpop.trf.xlu0
    %v690 = vpop.trf.xlu0
    %v691 = vpop.trf.xlu0
    %v692 = vpop.trf.xlu0
    %v693 = vpop.trf.xlu0
    %v694 = vpop.trf.xlu0
    %v695 = vpop.trf.xlu0
    %v696 = vpop.trf.xlu0
    %v697 = vpop.trf.xlu0
    %v698 = vpop.trf.xlu0
    %vm699 = vcmask 57344
    %700 = vst.msk [vmem:[%s6 + $0x8] sm:$0x1] %vm699, %v651
    %701 = vst.msk [vmem:[%s6 + $0x18] sm:$0x1] %vm699, %v683
    %vm702 = vcmask 65600
    %703 = vst.msk [vmem:[%s6 + $0x8] sm:$0x1] %vm702, 0.0
    %704 = vst.msk [vmem:[%s6 + $0x18] sm:$0x1] %vm702, 0.0
    // Predicated region
    $region38: #{tpu_custom_call.1} parent=1 // pred_check
      _
    $region39: #{tpu_custom_call.1} parent=1 // pred_check_branch
      %706 = sbr.rel (0) target = $region41
    $region40: #{tpu_custom_call.1} parent=1 // pred_region
      _
    $region41: #{tpu_custom_call.1} parent=1 // pred_fallthru
      _
    // Predicated region
    $region42: #{tpu_custom_call.1} parent=1 // pred_check
      _
    $region43: #{tpu_custom_call.1} parent=1 // pred_check_branch
      %708 = sbr.rel (0) target = $region45
    $region44: #{tpu_custom_call.1} parent=1 // pred_region
      %s710 = ssub.s32 256, 256
      %711 = vsyncadd [#allocation5], %s710
      %s712 = sshll.u32 [#allocation9], 4
      %s713 = int_to_ptr.vmem [resolvable:$true] %s712
      %718 = dma.vmem_to_hbm [thread:$0]  %s713, 256, %s7, [#allocation5], 128, 128, 8
    $region45: #{tpu_custom_call.1} parent=1 // pred_fallthru
      _
    // Predicated region
    $region46: #{tpu_custom_call.1} parent=1 // pred_check
      _
    $region47: #{tpu_custom_call.1} parent=1 // pred_check_branch
      %720 = sbr.rel (0) target = $region49
    $region48: #{tpu_custom_call.1} parent=1 // pred_region
      _
    $region49: #{tpu_custom_call.1} parent=1 // pred_fallthru
      _
    // Predicated region
    $region50: #{tpu_custom_call.1} parent=1 // pred_check
      _
    $region51: #{tpu_custom_call.1} parent=1 // pred_check_branch
      %722 = sbr.rel (0) target = $region53
    $region52: #{tpu_custom_call.1} parent=1 // pred_region
      %723 = dma.done [#allocation5], 256
    $region53: #{tpu_custom_call.1} parent=1 // pred_fallthru
      _
    %724 = vsyncpa [#allocation4], 1
    %725 = vsyncpa [#allocation7], 1
    %726 = vsyncpa [#allocation5], 1

</llo_original>
